<compile_context>
chip_gen: v5e
topology: v5e:2x2
jax: 0.10.0
libtpu: 0.0.40
codegen_flags: <defaults>
</compile_context>

<pallas_src>
import jax
import jax.numpy as jnp
from jax.experimental import pallas as pl
from jax.experimental.pallas import tpu as pltpu


# ---------------------------------------------------------------------------
# Kernels
# ---------------------------------------------------------------------------

def _linear_kernel(x_ref, w_ref, b_ref, o_ref):
    # Whole-K contraction: one MXU dot + bias add per (i, j) tile.
    # x_ref: (tm, K)  w_ref: (K, tn)  b_ref: (1, tn)  o_ref: (tm, tn)
    acc = jnp.dot(x_ref[...], w_ref[...], preferred_element_type=jnp.float32)
    o_ref[...] = (acc + b_ref[...].astype(jnp.float32)).astype(o_ref.dtype)


def _linear_kernel_ksplit(x_ref, w_ref, b_ref, o_ref, acc_ref):
    # Fallback for very large K. K is the innermost ("arbitrary") grid axis;
    # the f32 accumulator persists across it.  The accumulator is initialized
    # with the (broadcast) bias at k == 0 so no finalize add is needed.
    k = pl.program_id(2)

    @pl.when(k == 0)
    def _():
        acc_ref[...] = jnp.broadcast_to(
            b_ref[...].astype(jnp.float32), acc_ref.shape)

    acc_ref[...] += jnp.dot(x_ref[...], w_ref[...],
                            preferred_element_type=jnp.float32)

    @pl.when(k == pl.num_programs(2) - 1)
    def _():
        o_ref[...] = acc_ref[...].astype(o_ref.dtype)


# ---------------------------------------------------------------------------
# Per-generation tuning
# ---------------------------------------------------------------------------

def _tpu_generation():
    """Return (tm_target, vmem_budget_bytes, dual_core)."""
    kind = ""
    try:
        kind = jax.devices()[0].device_kind.lower()
    except Exception:
        pass
    vmem_cap = None
    try:
        vmem_cap = int(pltpu.get_tpu_info().vmem_capacity_bytes)
    except Exception:
        pass

    if "v7" in kind or (vmem_cap is not None and vmem_cap <= 64 * 1024 * 1024):
        # v7x: 64 MiB VMEM/TC (leave headroom), ~3.2 TB/s HBM, 2 TCs/chip.
        return 512, 50 * 1024 * 1024, True
    if "v5" in kind:
        # v5e: 0.82 TB/s HBM; tm ~512 already roughly balanced; 128 MiB VMEM.
        return 512, 100 * 1024 * 1024, False
    # v6e (and default): 918 TF/s vs 1.4 TB/s -> large tm to reach compute-bound.
    return 1024, 100 * 1024 * 1024, False


# ---------------------------------------------------------------------------
# Wrapper
# ---------------------------------------------------------------------------

def bert_encoder_forward(x, weight, bias, *, compute_dtype=jnp.bfloat16):
    """Equivalent of torch.nn.Linear forward (BertEncoder.forward).

    x:      (..., in_features)
    weight: (out_features, in_features)   -- PyTorch layout
    bias:   (out_features,)
    compute_dtype: dtype of the MXU operands (bf16 recommended).  Accumulation
        is always f32; the output keeps x.dtype.
    """
    orig_shape = x.shape
    K = orig_shape[-1]
    N, Kw = weight.shape
    assert K == Kw, "weight in_features mismatch"

    out_dtype = x.dtype
    cd = jnp.dtype(compute_dtype) if compute_dtype is not None else jnp.dtype(x.dtype)

    x2d = x.reshape(-1, K).astype(cd)
    # One-time wrapper transpose: kernel contracts (tm, tk) @ (tk, tn).
    w_t = weight.T.astype(cd)            # (K, N)
    b2d = bias.reshape(1, N)

    M = x2d.shape[0]
    isz = lambda d: jnp.dtype(d).itemsize

    tm_target, vmem_budget, dual_core = _tpu_generation()

    # ---- row (M) tile -----------------------------------------------------
    if M <= tm_target:
        tm = M                                    # full dim, no padding
    else:
        tm = None
        for c in sorted({c for c in (tm_target, 512, 256, 128) if c <= tm_target},
                        reverse=True):
            if M % c == 0:
                tm = c
                break
        if tm is None:
            tm = tm_target                        # pad M below to a full tile

    # ---- column (N) tile (lane-dense multiple of 128) ---------------------
    tn = next((c for c in (512, 256, 128) if N % c == 0), N)

    # ---- K tile: whole K unless the working set overflows VMEM ------------
    def working_set(tm_, tn_, tk_):
        ws = 2 * (tm_ * tk_ * isz(cd) + tk_ * tn_ * isz(cd) + tn_ * isz(b2d.dtype))
        ws += 2 * tm_ * tn_ * isz(out_dtype)
        if tk_ != K:
            ws += tm_ * tn_ * 4                   # f32 accumulator scratch
        return ws

    tk = K
    # Shrink tn (keeping it a multiple of 128 that divides N) before splitting K.
    while (working_set(tm, tn, tk) > vmem_budget and tn >= 256
           and tn % 256 == 0 and N % (tn // 2) == 0):
        tn //= 2
    if working_set(tm, tn, tk) > vmem_budget:
        tk = next((c for c in (2048, 1024, 512, 256, 128) if K % c == 0), K)

    # ---- v7x: make sure both TensorCores get work --------------------------
    m_tiles = pl.cdiv(M, tm)
    if dual_core and m_tiles == 1 and N // tn <= 1:
        for c in (512, 256, 128):
            if N % c == 0 and N // c >= 2:
                tn = c
                break

    # ---- pad M so every row tile is full (unmasked stores) -----------------
    Mp = M
    if M % tm != 0:
        Mp = ((M + tm - 1) // tm) * tm
        x2d = jnp.pad(x2d, ((0, Mp - M), (0, 0)))

    m_tiles = Mp // tm
    n_tiles = pl.cdiv(N, tn)

    ws = working_set(tm, tn, tk)
    vmem_limit = int(min(vmem_budget, max(2 * ws, 32 * 1024 * 1024)))

    # Accurate HBM traffic: weights are re-streamed once per M tile, x once
    # per N tile.
    cost = pl.CostEstimate(
        flops=2 * Mp * K * N,
        transcendentals=0,
        bytes_accessed=(Mp * K * isz(cd) * n_tiles
                        + K * N * isz(cd) * m_tiles
                        + N * isz(b2d.dtype) * m_tiles
                        + Mp * N * isz(out_dtype)),
    )

    if tk == K:
        grid = (m_tiles, n_tiles)
        kernel = _linear_kernel
        in_specs = [
            pl.BlockSpec((tm, K), lambda i, j: (i, 0)),    # x tile
            pl.BlockSpec((K, tn), lambda i, j: (0, j)),    # pre-transposed W tile
            pl.BlockSpec((1, tn), lambda i, j: (0, j)),    # bias tile
        ]
        out_specs = pl.BlockSpec((tm, tn), lambda i, j: (i, j))
        scratch_shapes = []
        dims = ("parallel", "parallel")
    else:
        grid = (m_tiles, n_tiles, K // tk)
        kernel = _linear_kernel_ksplit
        in_specs = [
            pl.BlockSpec((tm, tk), lambda i, j, k: (i, k)),
            pl.BlockSpec((tk, tn), lambda i, j, k: (k, j)),
            pl.BlockSpec((1, tn), lambda i, j, k: (0, j)),
        ]
        out_specs = pl.BlockSpec((tm, tn), lambda i, j, k: (i, j))
        scratch_shapes = [pltpu.VMEM((tm, tn), jnp.float32)]
        dims = ("parallel", "parallel", "arbitrary")   # K must stay innermost

    out = pl.pallas_call(
        kernel,
        out_shape=jax.ShapeDtypeStruct((Mp, N), out_dtype),
        grid_spec=pltpu.PrefetchScalarGridSpec(
            num_scalar_prefetch=0,
            grid=grid,
            in_specs=in_specs,
            out_specs=out_specs,
            scratch_shapes=scratch_shapes,
        ),
        compiler_params=pltpu.CompilerParams(
            dimension_semantics=dims,
            vmem_limit_bytes=vmem_limit,
        ),
        cost_estimate=cost,
    )(x2d, w_t, b2d)

    if Mp != M:
        out = out[:M]
    return out.reshape(*orig_shape[:-1], N)


# ---------------------------------------------------------------------------
# Self-test
# ---------------------------------------------------------------------------

if __name__ == "__main__":
    # Small shapes consistent with the module (hidden_size=256 from the spec,
    # input_size=128 so lane/contraction dims are multiples of 128).
    batch, seq, input_size, hidden_size = 2, 8, 128, 256

    key = jax.random.PRNGKey(0)
    kx, kw, kb = jax.random.split(key, 3)

    # nn.Linear parameters: weight [hidden, in], bias [hidden].
    weight = jax.random.normal(kw, (hidden_size, input_size), dtype=jnp.float32) * 0.02
    bias = jax.random.normal(kb, (hidden_size,), dtype=jnp.float32) * 0.02
    x = jax.random.normal(kx, (batch, seq, input_size), dtype=jnp.float32)

    ref = x @ weight.T + bias

    # f32 compute path: should match the f32 reference tightly.
    out_f32 = bert_encoder_forward(x, weight, bias, compute_dtype=jnp.float32)
    out_f32 = jax.block_until_ready(out_f32)
    assert out_f32.shape == (batch, seq, hidden_size)
    assert jnp.allclose(out_f32, ref, atol=1e-4, rtol=1e-4), \
        float(jnp.abs(out_f32 - ref).max())

    # Default bf16 compute path (MXU-native operands, f32 accumulate): looser
    # tolerance vs. the f32 reference.
    out_bf16 = bert_encoder_forward(x, weight, bias)
    out_bf16 = jax.block_until_ready(out_bf16)
    assert out_bf16.shape == (batch, seq, hidden_size)
    assert jnp.allclose(out_bf16, ref, atol=2e-2, rtol=2e-2), \
        float(jnp.abs(out_bf16 - ref).max())

    print("KERNEL_OK")
</pallas_src>

<mosaic_0001>
module attributes {stable_mosaic.version = 11 : i64} {
  func.func @_linear_kernel(%arg0: i32, %arg1: i32, %arg2: memref<16x128xf32, #tpu.memory_space<vmem>>, %arg3: memref<128x256xf32, #tpu.memory_space<vmem>>, %arg4: memref<1x256xf32, #tpu.memory_space<vmem>>, %arg5: memref<16x256xf32, #tpu.memory_space<vmem>>) attributes {dimension_semantics = [#tpu.dimension_semantics<parallel>, #tpu.dimension_semantics<parallel>], iteration_bounds = array<i64: 1, 1>, scalar_prefetch = 0 : i64, scratch_operands = 0 : i64, tpu.core_type = #tpu.core_type<tc>, window_params = [{transform_indices = @transform_0, window_bounds = array<i64: 16, 128>}, {transform_indices = @transform_1, window_bounds = array<i64: 128, 256>}, {transform_indices = @transform_2, window_bounds = array<i64: 1, 256>}, {transform_indices = @transform_3, window_bounds = array<i64: 16, 256>}]} {
    %c0 = arith.constant 0 : index
    %c0_0 = arith.constant 0 : index
    %0 = vector.load %arg2[%c0, %c0_0] : memref<16x128xf32, #tpu.memory_space<vmem>>, vector<16x128xf32>
    %c0_1 = arith.constant 0 : index
    %c0_2 = arith.constant 0 : index
    %1 = vector.load %arg3[%c0_1, %c0_2] : memref<128x256xf32, #tpu.memory_space<vmem>>, vector<128x256xf32>
    %cst = arith.constant dense<0.000000e+00> : vector<16x256xf32>
    %2 = tpu.matmul %0, %1, %cst {dimension_numbers = #tpu.dot_dimension_numbers<[1], [0], [0], [1], [0, 0, 1, 1], [], []>} : vector<16x128xf32>, vector<128x256xf32>, vector<16x256xf32> -> vector<16x256xf32>
    %c0_3 = arith.constant 0 : index
    %c0_4 = arith.constant 0 : index
    %3 = vector.load %arg4[%c0_3, %c0_4] : memref<1x256xf32, #tpu.memory_space<vmem>>, vector<1x256xf32>
    %4 = vector.broadcast %3 : vector<1x256xf32> to vector<16x256xf32>
    %5 = arith.addf %2, %4 : vector<16x256xf32>
    %c0_5 = arith.constant 0 : index
    %c0_6 = arith.constant 0 : index
    %6 = vector.load %arg5[%c0_5, %c0_6] : memref<16x256xf32, #tpu.memory_space<vmem>>, vector<16x256xf32>
    tpu.vector_store %arg5[%c0_5, %c0_6], %5 {strides = array<i32>} : memref<16x256xf32, #tpu.memory_space<vmem>>, vector<16x256xf32>,
    return
  }
  func.func @transform_0(%arg0: i32, %arg1: i32) -> (i32, i32) {
    %c0_i32 = arith.constant 0 : i32
    %c0_i32_0 = arith.constant 0 : i32
    return %arg0, %c0_i32 : i32, i32
  }
  func.func @transform_1(%arg0: i32, %arg1: i32) -> (i32, i32) {
    %c0_i32 = arith.constant 0 : i32
    %c0_i32_0 = arith.constant 0 : i32
    return %c0_i32, %arg1 : i32, i32
  }
  func.func @transform_2(%arg0: i32, %arg1: i32) -> (i32, i32) {
    %c0_i32 = arith.constant 0 : i32
    %c0_i32_0 = arith.constant 0 : i32
    return %c0_i32, %arg1 : i32, i32
  }
  func.func @transform_3(%arg0: i32, %arg1: i32) -> (i32, i32) {
    %c0_i32 = arith.constant 0 : i32
    return %arg0, %arg1 : i32, i32
  }
}

</mosaic_0001>

<llo_original>
// kernel: tpu_custom_call.1
$region0: #{tpu_custom_call.1}
  #allocation0 [shape = 'u32[]', space=smem, size = 0x4, offset = 0x4, fixed_abs, tag = 'smem constant byte address 0x4 - core index']
  #allocation1 [shape = 'u32[72,128]{1,0:T(1,128)}', space=vmem, size = 0x9000, scoped, tag = 'internal scratch']
  %s0 = inlined_call_operand.hbm [shape: f32[16,128], index: 0, kind: input, shape index: {}]
  %s1 = inlined_call_operand.hbm [shape: f32[128,256], index: 1, kind: input, shape index: {}]
  %s2 = inlined_call_operand.hbm [shape: f32[1,256], index: 2, kind: input, shape index: {}]
  %s3 = inlined_call_operand.hbm [shape: f32[16,256], index: 3, kind: output, shape index: {}]
  %s4 = sld [smem:[#allocation0]]
  $region34: #{tpu_custom_call.1} parent=0
    _
  %s6 = ssub.s32 1, %s4
  %s7 = scalar_select 0, %s6, %s4
  $region1: #{tpu_custom_call.1} parent=0
    #allocation2 [shape = 'u8[8192]{0}', space=vmem, size = 0x2000, scoped, tag = 'input window, operand 0, single buffered']
    #allocation3 [shape = 's32[1]{0}', space=sflag, size = 0x4, scoped, tag = 'scoped memory for tpu_custom_call.1']
    #allocation4 [shape = 's32[1]{0}', space=sflag, size = 0x4, scoped, tag = 'scoped memory for tpu_custom_call.1']
    #allocation5 [shape = 'u8[131072]{0}', space=vmem, size = 0x20000, scoped, tag = 'input window, operand 1, single buffered']
    #allocation6 [shape = 's32[1]{0}', space=sflag, size = 0x4, scoped, tag = 'scoped memory for tpu_custom_call.1']
    #allocation7 [shape = 'u8[1024]{0}', space=vmem, size = 0x400, scoped, tag = 'input window, operand 2, single buffered']
    #allocation8 [shape = 'u8[16384]{0}', space=vmem, size = 0x4000, scoped, tag = 'output window, operand 0, single buffered']
    %8 = vsyncpa [#allocation3], 0
    %9 = vsyncpa [#allocation6], 0
    %10 = vsyncpa [#allocation4], 0
    // Predicated region
    $region2: #{tpu_custom_call.1} parent=1 // pred_check
      _
    $region3: #{tpu_custom_call.1} parent=1 // pred_check_branch
      %12 = sbr.rel (0) target = $region5
    $region4: #{tpu_custom_call.1} parent=1 // pred_region
      %14 = vsyncadd [#allocation3], 0
      %s15 = sshll.u32 %s0, 4
      %s16 = int_to_ptr.hbm [resolvable:$true] %s15
      %s17 = sshll.u32 [#allocation2], 4
      %s18 = int_to_ptr.vmem [resolvable:$true] %s17
      %23 = dma.hbm_to_vmem [thread:$0]  %s16, 256, %s18, [#allocation3], 128, 128, 8
    $region5: #{tpu_custom_call.1} parent=1 // pred_fallthru
      _
    // Predicated region
    $region6: #{tpu_custom_call.1} parent=1 // pred_check
      _
    $region7: #{tpu_custom_call.1} parent=1 // pred_check_branch
      %25 = sbr.rel (0) target = $region9
    $region8: #{tpu_custom_call.1} parent=1 // pred_region
      %27 = vsyncadd [#allocation6], 0
      %s28 = sshll.u32 %s1, 4
      %s29 = int_to_ptr.hbm [resolvable:$true] %s28
      %s30 = sshll.u32 [#allocation5], 4
      %s31 = int_to_ptr.vmem [resolvable:$true] %s30
      %36 = dma.hbm_to_vmem [thread:$0]  %s29, 4096, %s31, [#allocation6], 256, 256, 16
    $region9: #{tpu_custom_call.1} parent=1 // pred_fallthru
      _
    // Predicated region
    $region10: #{tpu_custom_call.1} parent=1 // pred_check
      _
    $region11: #{tpu_custom_call.1} parent=1 // pred_check_branch
      %38 = sbr.rel (0) target = $region13
    $region12: #{tpu_custom_call.1} parent=1 // pred_region
      %40 = vsyncadd [#allocation6], 0
      %s42 = sshll.u32 %s2, 4
      %s43 = int_to_ptr.hbm [resolvable:$true] %s42
      %s44 = sshll.u32 [#allocation7], 4
      %s45 = int_to_ptr.vmem [resolvable:$true] %s44
      %47 = dma.hbm_to_vmem [thread:$0]  %s43, 32, %s45, [#allocation6]
    $region13: #{tpu_custom_call.1} parent=1 // pred_fallthru
      _
    // Predicated region
    $region14: #{tpu_custom_call.1} parent=1 // pred_check
      _
    $region15: #{tpu_custom_call.1} parent=1 // pred_check_branch
      %49 = sbr.rel (0) target = $region17
    $region16: #{tpu_custom_call.1} parent=1 // pred_region
      %51 = dma.done [#allocation3], 256
    $region17: #{tpu_custom_call.1} parent=1 // pred_fallthru
      _
    // Predicated region
    $region18: #{tpu_custom_call.1} parent=1 // pred_check
      _
    $region19: #{tpu_custom_call.1} parent=1 // pred_check_branch
      %53 = sbr.rel (0) target = $region21
    $region20: #{tpu_custom_call.1} parent=1 // pred_region
      %55 = dma.done [#allocation6], 4096
    $region21: #{tpu_custom_call.1} parent=1 // pred_fallthru
      _
    // Predicated region
    $region22: #{tpu_custom_call.1} parent=1 // pred_check
      _
    $region23: #{tpu_custom_call.1} parent=1 // pred_check_branch
      %57 = sbr.rel (0) target = $region25
    $region24: #{tpu_custom_call.1} parent=1 // pred_region
      %59 = dma.done [#allocation6], 32
    $region25: #{tpu_custom_call.1} parent=1 // pred_fallthru
      _
    %v60 = vld [vmem:[#allocation2] sm:$0xff]
    %v61 = vld [vmem:[#allocation2 + $0x8] sm:$0xff]
    %v62 = vld [vmem:[#allocation5] sm:$0xff]
    %v63 = vld [vmem:[#allocation5 + $0x8] sm:$0xff]
    %v64 = vld [vmem:[#allocation5 + $0x10] sm:$0xff]
    %v65 = vld [vmem:[#allocation5 + $0x18] sm:$0xff]
    %v66 = vld [vmem:[#allocation5 + $0x20] sm:$0xff]
    %v67 = vld [vmem:[#allocation5 + $0x28] sm:$0xff]
    %v68 = vld [vmem:[#allocation5 + $0x30] sm:$0xff]
    %v69 = vld [vmem:[#allocation5 + $0x38] sm:$0xff]
    %v70 = vld [vmem:[#allocation5 + $0x40] sm:$0xff]
    %v71 = vld [vmem:[#allocation5 + $0x48] sm:$0xff]
    %v72 = vld [vmem:[#allocation5 + $0x50] sm:$0xff]
    %v73 = vld [vmem:[#allocation5 + $0x58] sm:$0xff]
    %v74 = vld [vmem:[#allocation5 + $0x60] sm:$0xff]
    %v75 = vld [vmem:[#allocation5 + $0x68] sm:$0xff]
    %v76 = vld [vmem:[#allocation5 + $0x70] sm:$0xff]
    %v77 = vld [vmem:[#allocation5 + $0x78] sm:$0xff]
    %v78 = vld [vmem:[#allocation5 + $0x80] sm:$0xff]
    %v79 = vld [vmem:[#allocation5 + $0x88] sm:$0xff]
    %v80 = vld [vmem:[#allocation5 + $0x90] sm:$0xff]
    %v81 = vld [vmem:[#allocation5 + $0x98] sm:$0xff]
    %v82 = vld [vmem:[#allocation5 + $0xa0] sm:$0xff]
    %v83 = vld [vmem:[#allocation5 + $0xa8] sm:$0xff]
    %v84 = vld [vmem:[#allocation5 + $0xb0] sm:$0xff]
    %v85 = vld [vmem:[#allocation5 + $0xb8] sm:$0xff]
    %v86 = vld [vmem:[#allocation5 + $0xc0] sm:$0xff]
    %v87 = vld [vmem:[#allocation5 + $0xc8] sm:$0xff]
    %v88 = vld [vmem:[#allocation5 + $0xd0] sm:$0xff]
    %v89 = vld [vmem:[#allocation5 + $0xd8] sm:$0xff]
    %v90 = vld [vmem:[#allocation5 + $0xe0] sm:$0xff]
    %v91 = vld [vmem:[#allocation5 + $0xe8] sm:$0xff]
    %v92 = vld [vmem:[#allocation5 + $0xf0] sm:$0xff]
    %v93 = vld [vmem:[#allocation5 + $0xf8] sm:$0xff]
    %v94 = vld [vmem:[#allocation7] sm:$0x3]
    %v96 = vperm.slane %v94, 0
    %v97 = vperm.slane %v94, 1
    %100 = vmatpush.msra.mxu0 %v92
    %101 = vmatpush.msra.mxu0 %v90
    %102 = vmatpush.msra.mxu0 %v88
    %103 = vmatpush.msra.mxu0 %v86
    %104 = vmatpush.msra.mxu0 %v84
    %105 = vmatpush.msra.mxu0 %v82
    %106 = vmatpush.msra.mxu0 %v80
    %107 = vmatpush.msra.mxu0 %v78
    %108 = vmatpush.msra.mxu0 %v76
    %109 = vmatpush.msra.mxu0 %v74
    %110 = vmatpush.msra.mxu0 %v72
    %111 = vmatpush.msra.mxu0 %v70
    %112 = vmatpush.msra.mxu0 %v68
    %113 = vmatpush.msra.mxu0 %v66
    %114 = vmatpush.msra.mxu0 %v64
    %115 = vmatpush.msra.mxu0 %v62
    %116 = vmatmul.f32.gmra.mxu0 %v60
    %v117 = vpop.f32.mrf.mxu0
    %v118 = vadd.f32 %v96, %v117
    %119 = vmatmul.f32.gmra.mxu0 %v61
    %v120 = vpop.f32.mrf.mxu0
    %v121 = vadd.f32 %v96, %v120
    %122 = vdwg.mxu0
    %123 = vmatpush.msra.mxu0 %v93
    %124 = vmatpush.msra.mxu0 %v91
    %125 = vmatpush.msra.mxu0 %v89
    %126 = vmatpush.msra.mxu0 %v87
    %127 = vmatpush.msra.mxu0 %v85
    %128 = vmatpush.msra.mxu0 %v83
    %129 = vmatpush.msra.mxu0 %v81
    %130 = vmatpush.msra.mxu0 %v79
    %131 = vmatpush.msra.mxu0 %v77
    %132 = vmatpush.msra.mxu0 %v75
    %133 = vmatpush.msra.mxu0 %v73
    %134 = vmatpush.msra.mxu0 %v71
    %135 = vmatpush.msra.mxu0 %v69
    %136 = vmatpush.msra.mxu0 %v67
    %137 = vmatpush.msra.mxu0 %v65
    %138 = vmatpush.msra.mxu0 %v63
    %139 = vmatmul.f32.gmra.mxu0 %v60
    %v140 = vpop.f32.mrf.mxu0
    %v141 = vadd.f32 %v97, %v140
    %142 = vmatmul.f32.gmra.mxu0 %v61
    %v143 = vpop.f32.mrf.mxu0
    %v144 = vadd.f32 %v97, %v143
    %145 = vdwg.mxu0
    %146 = vst [vmem:[#allocation8] sm:$0xff] %v118
    %147 = vst [vmem:[#allocation8 + $0x8] sm:$0xff] %v141
    %148 = vst [vmem:[#allocation8 + $0x10] sm:$0xff] %v121
    %149 = vst [vmem:[#allocation8 + $0x18] sm:$0xff] %v144
    // Predicated region
    $region26: #{tpu_custom_call.1} parent=1 // pred_check
      _
    $region27: #{tpu_custom_call.1} parent=1 // pred_check_branch
      %151 = sbr.rel (0) target = $region29
    $region28: #{tpu_custom_call.1} parent=1 // pred_region
      %153 = vsyncadd [#allocation4], 0
      %s154 = sshll.u32 [#allocation8], 4
      %s155 = int_to_ptr.vmem [resolvable:$true] %s154
      %s156 = sshll.u32 %s3, 4
      %s157 = int_to_ptr.hbm [resolvable:$true] %s156
      %162 = dma.vmem_to_hbm [thread:$0]  %s155, 512, %s157, [#allocation4], 256, 256, 16
    $region29: #{tpu_custom_call.1} parent=1 // pred_fallthru
      _
    // Predicated region
    $region30: #{tpu_custom_call.1} parent=1 // pred_check
      _
    $region31: #{tpu_custom_call.1} parent=1 // pred_check_branch
      %164 = sbr.rel (0) target = $region33
    $region32: #{tpu_custom_call.1} parent=1 // pred_region
      %166 = dma.done [#allocation4], 512
    $region33: #{tpu_custom_call.1} parent=1 // pred_fallthru
      _
    %167 = vsyncpa [#allocation3], 1
    %168 = vsyncpa [#allocation6], 1
    %169 = vsyncpa [#allocation4], 1

</llo_original>
